<compile_context>
chip_gen: v5e
topology: v5e:2x2
jax: 0.10.0
libtpu: 0.0.40
codegen_flags: <defaults>
</compile_context>

<pallas_src>
import functools

import jax
import jax.numpy as jnp
from jax.experimental import pallas as pl
from jax.experimental.pallas import tpu as pltpu


# --------------------------------------------------------------------------
# Kernel 1: global average + max pooling over the spatial (HW) axis.
# --------------------------------------------------------------------------
def _pool_kernel(x_ref, stats_ref, sum_vec, max_vec, *,
                 hw, hw_tile, acc_w, needs_mask):
    """Grid = (B, C tiles, HW tiles); HW is the innermost reduction axis.

    x_ref    : (C_TILE, HW_TILE)   current spatial tile (batch dim squeezed)
    stats_ref: (C_TILE, 2)         [:, 0] = mean, [:, 1] = max (written once)
    sum_vec  : (C_TILE, ACC_W) f32 scratch, running elementwise sum
    max_vec  : (C_TILE, ACC_W) f32 scratch, running elementwise max
    """
    k = pl.program_id(2)
    n_steps = pl.num_programs(2)

    @pl.when(k == 0)
    def _init():
        sum_vec[...] = jnp.zeros_like(sum_vec)
        max_vec[...] = jnp.full_like(max_vec, -jnp.inf)

    n_chunks = hw_tile // acc_w

    def accumulate(masked):
        # Static (unrolled) chunk loop; chunk width matches accumulator lanes.
        for c in range(n_chunks):
            off = c * acc_w                                        # static
            xc = x_ref[:, pl.ds(off, acc_w)].astype(jnp.float32)   # (C_TILE, ACC_W)
            if masked:
                lane = jax.lax.broadcasted_iota(jnp.int32, xc.shape, 1)
                valid = (k * hw_tile + off + lane) < hw
                xs = jnp.where(valid, xc, 0.0)
                xm = jnp.where(valid, xc, -jnp.inf)
            else:
                xs = xc
                xm = xc
            sum_vec[...] = sum_vec[...] + xs
            max_vec[...] = jnp.maximum(max_vec[...], xm)

    if needs_mask:
        # Only the last (partial) spatial tile pays the masking cost.
        @pl.when(k != n_steps - 1)
        def _fast():
            accumulate(False)

        @pl.when(k == n_steps - 1)
        def _edge():
            accumulate(True)
    else:
        accumulate(False)

    # Finalize: cross-lane reduce the vector accumulators once, scale by the
    # true 1/HW (required for correctness once HW is tiled), store (C_TILE, 2).
    @pl.when(k == n_steps - 1)
    def _finalize():
        mean_col = jnp.sum(sum_vec[...], axis=1, keepdims=True) * (1.0 / hw)
        max_col = jnp.max(max_vec[...], axis=1, keepdims=True)
        stats_ref[...] = jnp.concatenate(
            [mean_col, max_col], axis=1).astype(stats_ref.dtype)


# --------------------------------------------------------------------------
# Kernel 2: shared MLP + sigmoid on the pooled rows (tiny, one dot per layer).
# --------------------------------------------------------------------------
def _mlp_kernel(p_ref, w1_ref, w2_ref, o_ref, *, batch):
    """sigmoid(fc2(relu(fc1(avg))) + fc2(relu(fc1(max)))).

    p_ref : (R, C) with R = round_up(2*B, 8); rows [0, B) = mean-pooled rows,
            rows [B, 2B) = max-pooled rows, remaining rows zero padding.
    w1_ref: (C, C_r)    w2_ref: (C_r, C)    o_ref: (B, C)
    """
    p = p_ref[...].astype(jnp.float32)
    w1 = w1_ref[...].astype(jnp.float32)
    w2 = w2_ref[...].astype(jnp.float32)
    h = jnp.maximum(jnp.dot(p, w1, preferred_element_type=jnp.float32), 0.0)
    y = jnp.dot(h, w2, preferred_element_type=jnp.float32)       # (R, C)
    out = jax.nn.sigmoid(y[:batch, :] + y[batch:2 * batch, :])   # (B, C)
    o_ref[...] = out.astype(o_ref.dtype)


# --------------------------------------------------------------------------
# Wrapper
# --------------------------------------------------------------------------
_MAX_HW_TILE = 2048   # lanes; 256*2048*4B = 2 MiB/buffer (x2 double-buffered)


def _pick_c_tile(c):
    if c <= 256:
        return c
    for t in (256, 128, 64, 32, 16, 8):
        if c % t == 0:
            return t
    return c


def channel_attention(x, w1, w2, *, max_hw_tile=_MAX_HW_TILE):
    """x: (B, C, H, W); w1: (C, C_r); w2: (C_r, C)  ->  (B, C, 1, 1) in x.dtype."""
    B, C, H, W = x.shape
    HW = H * W

    c_tile = _pick_c_tile(C)
    hw_tile = HW if HW <= max_hw_tile else max_hw_tile        # multiple of 128
    needs_mask = (HW % hw_tile) != 0
    acc_w = 128 if hw_tile % 128 == 0 else hw_tile

    x_flat = x.reshape(B, C, HW)       # free: NCHW is contiguous over (H, W)

    pool = pl.pallas_call(
        functools.partial(_pool_kernel, hw=HW, hw_tile=hw_tile, acc_w=acc_w,
                          needs_mask=needs_mask),
        out_shape=jax.ShapeDtypeStruct((B, C, 2), jnp.float32),
        grid_spec=pltpu.PrefetchScalarGridSpec(
            num_scalar_prefetch=0,
            grid=(B, C // c_tile, pl.cdiv(HW, hw_tile)),
            in_specs=[pl.BlockSpec((pl.Squeezed(), c_tile, hw_tile),
                                   lambda b, c, k: (b, c, k))],
            # Output block constant across the reduction axis (accumulator
            # pattern); it is tiny (2 values/channel), written once at the end.
            out_specs=pl.BlockSpec((pl.Squeezed(), c_tile, 2),
                                   lambda b, c, k: (b, c, 0)),
            scratch_shapes=[pltpu.VMEM((c_tile, acc_w), jnp.float32),
                            pltpu.VMEM((c_tile, acc_w), jnp.float32)],
        ),
        compiler_params=pltpu.CompilerParams(
            dimension_semantics=("parallel", "parallel", "arbitrary")),
        cost_estimate=pl.CostEstimate(
            flops=2 * B * C * HW,                         # sum + max streaming
            transcendentals=0,
            bytes_accessed=B * C * HW * x.dtype.itemsize + B * C * 2 * 4),
    )
    stats = pool(x_flat)                                   # (B, C, 2) float32

    # ---- tiny MLP stage (negligible FLOPs): stack avg & max rows of all
    # batch elements into one LHS, pad to a multiple of 8 sublanes. ----------
    pooled = jnp.concatenate([stats[..., 0], stats[..., 1]], axis=0)  # (2B, C)
    pad = (-2 * B) % 8
    if pad:
        pooled = jnp.pad(pooled, ((0, pad), (0, 0)))

    mlp = pl.pallas_call(
        functools.partial(_mlp_kernel, batch=B),
        out_shape=jax.ShapeDtypeStruct((B, C), x.dtype),
    )
    attn = mlp(pooled, w1, w2)                             # (B, C)
    return attn.reshape(B, C, 1, 1)


# --------------------------------------------------------------------------
# Pure-JAX reference (matches the PyTorch forward).
# --------------------------------------------------------------------------
def reference_channel_attention(x, w1, w2):
    xf = x.astype(jnp.float32)
    avg = jnp.mean(xf, axis=(2, 3))                        # (B, C)
    mx = jnp.max(xf, axis=(2, 3))                          # (B, C)
    w1f = w1.astype(jnp.float32)
    w2f = w2.astype(jnp.float32)
    out_avg = jnp.maximum(avg @ w1f, 0.0) @ w2f
    out_max = jnp.maximum(mx @ w1f, 0.0) @ w2f
    out = jax.nn.sigmoid(out_avg + out_max).astype(x.dtype)
    return out[:, :, None, None]


if __name__ == "__main__":
    ratio = 8
    key = jax.random.PRNGKey(0)

    def run_case(B, C, H, W, max_hw_tile=_MAX_HW_TILE):
        kx, k1, k2 = jax.random.split(jax.random.fold_in(key, H * W + C), 3)
        C_r = C // ratio
        x = jax.random.normal(kx, (B, C, H, W), dtype=jnp.float32)
        # fc1 / fc2 1x1-conv weights, stored pre-transposed (row-vector matmul).
        w1 = jax.random.normal(k1, (C, C_r), dtype=jnp.float32) * 0.1
        w2 = jax.random.normal(k2, (C_r, C), dtype=jnp.float32) * 0.1

        fn = jax.jit(functools.partial(channel_attention,
                                       max_hw_tile=max_hw_tile))
        out = jax.block_until_ready(fn(x, w1, w2))
        ref = reference_channel_attention(x, w1, w2)
        assert out.shape == (B, C, 1, 1)
        assert jnp.allclose(out, ref, atol=1e-5, rtol=1e-5), (
            float(jnp.max(jnp.abs(out - ref))))

    # Small canonical case (single spatial step, no mask).
    run_case(2, 16, 16, 16)
    # Odd spatial extent (lane dim equals full array dim, HW < 128).
    run_case(2, 16, 9, 9)
    # Multi-step spatial reduction with a partial (masked) trailing tile.
    run_case(2, 16, 20, 20, max_hw_tile=128)

    print("KERNEL_OK")
</pallas_src>

<mosaic_0001>
module attributes {stable_mosaic.version = 11 : i64} {
  func.func @_pool_kernel(%arg0: i32, %arg1: i32, %arg2: i32, %arg3: memref<1x16x256xf32, #tpu.memory_space<vmem>>, %arg4: memref<1x16x2xf32, #tpu.memory_space<vmem>>, %arg5: memref<16x128xf32, #tpu.memory_space<vmem>>, %arg6: memref<16x128xf32, #tpu.memory_space<vmem>>) attributes {dimension_semantics = [#tpu.dimension_semantics<parallel>, #tpu.dimension_semantics<parallel>, #tpu.dimension_semantics<arbitrary>], iteration_bounds = array<i64: 2, 1, 1>, scalar_prefetch = 0 : i64, scratch_operands = 2 : i64, tpu.core_type = #tpu.core_type<tc>, window_params = [{transform_indices = @transform_0, window_bounds = array<i64: 1, 16, 256>}, {transform_indices = @transform_1, window_bounds = array<i64: 1, 16, 2>}]} {
    %c0_i32 = arith.constant 0 : i32
    %0 = arith.cmpi eq, %arg2, %c0_i32 : i32
    %1 = arith.extui %0 : i1 to i32
    %c0_i32_0 = arith.constant 0 : i32
    %2 = arith.cmpi ne, %1, %c0_i32_0 : i32
    scf.if %2 {
      %cst = arith.constant 0.000000e+00 : f32
      %22 = vector.broadcast %cst : f32 to vector<16x128xf32>
      %c0_23 = arith.constant 0 : index
      %c0_24 = arith.constant 0 : index
      %23 = vector.load %arg5[%c0_23, %c0_24] : memref<16x128xf32, #tpu.memory_space<vmem>>, vector<16x128xf32>
      tpu.vector_store %arg5[%c0_23, %c0_24], %22 {strides = array<i32>} : memref<16x128xf32, #tpu.memory_space<vmem>>, vector<16x128xf32>,
      %cst_25 = arith.constant 0xFF800000 : f32
      %24 = vector.broadcast %cst_25 : f32 to vector<16x128xf32>
      %c0_26 = arith.constant 0 : index
      %c0_27 = arith.constant 0 : index
      %25 = vector.load %arg6[%c0_26, %c0_27] : memref<16x128xf32, #tpu.memory_space<vmem>>, vector<16x128xf32>
      tpu.vector_store %arg6[%c0_26, %c0_27], %24 {strides = array<i32>} : memref<16x128xf32, #tpu.memory_space<vmem>>, vector<16x128xf32>,
    } else {
    }
    %c0 = arith.constant 0 : index
    %c0_1 = arith.constant 0 : index
    %c0_2 = arith.constant 0 : index
    %3 = vector.load %arg3[%c0, %c0_1, %c0_2] : memref<1x16x256xf32, #tpu.memory_space<vmem>>, vector<1x16x128xf32>
    %4 = vector.shape_cast %3 : vector<1x16x128xf32> to vector<16x128xf32>
    %c0_3 = arith.constant 0 : index
    %c0_4 = arith.constant 0 : index
    %5 = vector.load %arg5[%c0_3, %c0_4] : memref<16x128xf32, #tpu.memory_space<vmem>>, vector<16x128xf32>
    %6 = arith.addf %5, %4 : vector<16x128xf32>
    %c0_5 = arith.constant 0 : index
    %c0_6 = arith.constant 0 : index
    %7 = vector.load %arg5[%c0_5, %c0_6] : memref<16x128xf32, #tpu.memory_space<vmem>>, vector<16x128xf32>
    tpu.vector_store %arg5[%c0_5, %c0_6], %6 {strides = array<i32>} : memref<16x128xf32, #tpu.memory_space<vmem>>, vector<16x128xf32>,
    %c0_7 = arith.constant 0 : index
    %c0_8 = arith.constant 0 : index
    %8 = vector.load %arg6[%c0_7, %c0_8] : memref<16x128xf32, #tpu.memory_space<vmem>>, vector<16x128xf32>
    %9 = arith.maximumf %8, %4 : vector<16x128xf32>
    %c0_9 = arith.constant 0 : index
    %c0_10 = arith.constant 0 : index
    %10 = vector.load %arg6[%c0_9, %c0_10] : memref<16x128xf32, #tpu.memory_space<vmem>>, vector<16x128xf32>
    tpu.vector_store %arg6[%c0_9, %c0_10], %9 {strides = array<i32>} : memref<16x128xf32, #tpu.memory_space<vmem>>, vector<16x128xf32>,
    %c0_11 = arith.constant 0 : index
    %c0_12 = arith.constant 0 : index
    %c128 = arith.constant 128 : index
    %11 = vector.load %arg3[%c0_11, %c0_12, %c128] : memref<1x16x256xf32, #tpu.memory_space<vmem>>, vector<1x16x128xf32>
    %12 = vector.shape_cast %11 : vector<1x16x128xf32> to vector<16x128xf32>
    %c0_13 = arith.constant 0 : index
    %c0_14 = arith.constant 0 : index
    %13 = vector.load %arg5[%c0_13, %c0_14] : memref<16x128xf32, #tpu.memory_space<vmem>>, vector<16x128xf32>
    %14 = arith.addf %13, %12 : vector<16x128xf32>
    %c0_15 = arith.constant 0 : index
    %c0_16 = arith.constant 0 : index
    %15 = vector.load %arg5[%c0_15, %c0_16] : memref<16x128xf32, #tpu.memory_space<vmem>>, vector<16x128xf32>
    tpu.vector_store %arg5[%c0_15, %c0_16], %14 {strides = array<i32>} : memref<16x128xf32, #tpu.memory_space<vmem>>, vector<16x128xf32>,
    %c0_17 = arith.constant 0 : index
    %c0_18 = arith.constant 0 : index
    %16 = vector.load %arg6[%c0_17, %c0_18] : memref<16x128xf32, #tpu.memory_space<vmem>>, vector<16x128xf32>
    %17 = arith.maximumf %16, %12 : vector<16x128xf32>
    %c0_19 = arith.constant 0 : index
    %c0_20 = arith.constant 0 : index
    %18 = vector.load %arg6[%c0_19, %c0_20] : memref<16x128xf32, #tpu.memory_space<vmem>>, vector<16x128xf32>
    tpu.vector_store %arg6[%c0_19, %c0_20], %17 {strides = array<i32>} : memref<16x128xf32, #tpu.memory_space<vmem>>, vector<16x128xf32>,
    %c0_i32_21 = arith.constant 0 : i32
    %19 = arith.cmpi eq, %arg2, %c0_i32_21 : i32
    %20 = arith.extui %19 : i1 to i32
    %c0_i32_22 = arith.constant 0 : i32
    %21 = arith.cmpi ne, %20, %c0_i32_22 : i32
    scf.if %21 {
      %c0_23 = arith.constant 0 : index
      %c0_24 = arith.constant 0 : index
      %22 = vector.load %arg5[%c0_23, %c0_24] : memref<16x128xf32, #tpu.memory_space<vmem>>, vector<16x128xf32>
      %cst = arith.constant dense<0.000000e+00> : vector<16xf32>
      %23 = vector.multi_reduction <add>, %22, %cst [1] : vector<16x128xf32> to vector<16xf32>
      %24 = vector.shape_cast %23 : vector<16xf32> to vector<16x1xf32>
      %cst_25 = arith.constant 3.906250e-03 : f32
      %25 = vector.broadcast %cst_25 : f32 to vector<16x1xf32>
      %26 = arith.mulf %24, %25 : vector<16x1xf32>
      %c0_26 = arith.constant 0 : index
      %c0_27 = arith.constant 0 : index
      %27 = vector.load %arg6[%c0_26, %c0_27] : memref<16x128xf32, #tpu.memory_space<vmem>>, vector<16x128xf32>
      %cst_28 = arith.constant dense<0xFF800000> : vector<16xf32>
      %28 = vector.multi_reduction <maximumf>, %27, %cst_28 [1] : vector<16x128xf32> to vector<16xf32>
      %29 = vector.shape_cast %28 : vector<16xf32> to vector<16x1xf32>
      %30 = tpu.concatenate %26, %29 in 1 : vector<16x1xf32>, vector<16x1xf32> -> vector<16x2xf32>
      %c0_29 = arith.constant 0 : index
      %c0_30 = arith.constant 0 : index
      %c0_31 = arith.constant 0 : index
      %31 = vector.load %arg4[%c0_29, %c0_30, %c0_31] : memref<1x16x2xf32, #tpu.memory_space<vmem>>, vector<1x16x2xf32>
      %32 = vector.shape_cast %31 : vector<1x16x2xf32> to vector<16x2xf32>
      %33 = vector.shape_cast %30 : vector<16x2xf32> to vector<1x16x2xf32>
      tpu.vector_store %arg4[%c0_29, %c0_30, %c0_31], %33 {strides = array<i32>} : memref<1x16x2xf32, #tpu.memory_space<vmem>>, vector<1x16x2xf32>,
    } else {
    }
    return
  }
  func.func @transform_0(%arg0: i32, %arg1: i32, %arg2: i32) -> (i32, i32, i32) {
    %c0_i32 = arith.constant 0 : i32
    return %arg0, %arg1, %arg2 : i32, i32, i32
  }
  func.func @transform_1(%arg0: i32, %arg1: i32, %arg2: i32) -> (i32, i32, i32) {
    %c0_i32 = arith.constant 0 : i32
    %c0_i32_0 = arith.constant 0 : i32
    return %arg0, %arg1, %c0_i32 : i32, i32, i32
  }
}

module attributes {stable_mosaic.version = 11 : i64} {
  func.func @_mlp_kernel(%arg0: memref<8x16xf32, #tpu.memory_space<vmem>>, %arg1: memref<16x2xf32, #tpu.memory_space<vmem>>, %arg2: memref<2x16xf32, #tpu.memory_space<vmem>>, %arg3: memref<2x16xf32, #tpu.memory_space<vmem>>) attributes {dimension_semantics = [], scalar_prefetch = 0 : i64, scratch_operands = 0 : i64, tpu.core_type = #tpu.core_type<tc>} {
    %c0 = arith.constant 0 : index
    %c0_0 = arith.constant 0 : index
    %0 = vector.load %arg0[%c0, %c0_0] : memref<8x16xf32, #tpu.memory_space<vmem>>, vector<8x16xf32>
    %c0_1 = arith.constant 0 : index
    %c0_2 = arith.constant 0 : index
    %1 = vector.load %arg1[%c0_1, %c0_2] : memref<16x2xf32, #tpu.memory_space<vmem>>, vector<16x2xf32>
    %c0_3 = arith.constant 0 : index
    %c0_4 = arith.constant 0 : index
    %2 = vector.load %arg2[%c0_3, %c0_4] : memref<2x16xf32, #tpu.memory_space<vmem>>, vector<2x16xf32>
    %cst = arith.constant dense<0.000000e+00> : vector<8x2xf32>
    %3 = tpu.matmul %0, %1, %cst {dimension_numbers = #tpu.dot_dimension_numbers<[1], [0], [0], [1], [0, 0, 1, 1], [], []>} : vector<8x16xf32>, vector<16x2xf32>, vector<8x2xf32> -> vector<8x2xf32>
    %cst_5 = arith.constant 0.000000e+00 : f32
    %4 = vector.broadcast %cst_5 : f32 to vector<8x2xf32>
    %5 = arith.maximumf %3, %4 : vector<8x2xf32>
    %cst_6 = arith.constant dense<0.000000e+00> : vector<8x16xf32>
    %6 = tpu.matmul %5, %2, %cst_6 {dimension_numbers = #tpu.dot_dimension_numbers<[1], [0], [0], [1], [0, 0, 1, 1], [], []>} : vector<8x2xf32>, vector<2x16xf32>, vector<8x16xf32> -> vector<8x16xf32>
    %7 = vector.extract_strided_slice %6 {offsets = [0, 0], sizes = [2, 16], strides = [1, 1]} : vector<8x16xf32> to vector<2x16xf32>
    %8 = vector.extract_strided_slice %6 {offsets = [2, 0], sizes = [2, 16], strides = [1, 1]} : vector<8x16xf32> to vector<2x16xf32>
    %9 = arith.addf %7, %8 : vector<2x16xf32>
    %10 = arith.negf %9 : vector<2x16xf32>
    %11 = math.exp %10 : vector<2x16xf32>
    %cst_7 = arith.constant 1.000000e+00 : f32
    %12 = vector.broadcast %cst_7 : f32 to vector<2x16xf32>
    %13 = arith.addf %12, %11 : vector<2x16xf32>
    %14 = arith.divf %12, %13 : vector<2x16xf32>
    %c0_8 = arith.constant 0 : index
    %c0_9 = arith.constant 0 : index
    %15 = vector.load %arg3[%c0_8, %c0_9] : memref<2x16xf32, #tpu.memory_space<vmem>>, vector<2x16xf32>
    tpu.vector_store %arg3[%c0_8, %c0_9], %14 {strides = array<i32>} : memref<2x16xf32, #tpu.memory_space<vmem>>, vector<2x16xf32>,
    return
  }
}

</mosaic_0001>

<llo_original>
// kernel: channel_attention.3
$region0: #{channel_attention.3}
  #allocation0 [shape = 'u32[]', space=smem, size = 0x4, offset = 0x4, fixed_abs, tag = 'smem constant byte address 0x4 - core index']
  #allocation1 [shape = 'u32[72,128]{1,0:T(1,128)}', space=vmem, size = 0x9000, scoped, tag = 'internal scratch']
  %s0 = inlined_call_operand.vmem [shape: f32[8,16], index: 0, kind: input, shape index: {}]
  %s1 = inlined_call_operand.vmem [shape: f32[16,2], index: 1, kind: input, shape index: {}]
  %s2 = inlined_call_operand.vmem [shape: f32[2,16], index: 2, kind: input, shape index: {}]
  %s3 = inlined_call_operand.hbm [shape: f32[2,16], index: 3, kind: output, shape index: {}]
  %s4 = sld [smem:[#allocation0]]
  $region22: #{channel_attention.3} parent=0
    _
  %s6 = ssub.s32 1, %s4
  %s7 = scalar_select 0, %s6, %s4
  $region1: #{channel_attention.3} parent=0
    #allocation2 [shape = 'u8[1024]{0}', space=vmem, size = 0x400, scoped, tag = 'output window, operand 0, single buffered']
    #allocation3 [shape = 's32[1]{0}', space=sflag, size = 0x4, scoped, tag = 'scoped memory for channel_attention.3']
    %8 = vsyncpa [#allocation3], 0
    // Predicated region
    $region2: #{channel_attention.3} parent=1 // pred_check
      _
    $region3: #{channel_attention.3} parent=1 // pred_check_branch
      %10 = sbr.rel (0) target = $region5
    $region4: #{channel_attention.3} parent=1 // pred_region
      _
    $region5: #{channel_attention.3} parent=1 // pred_fallthru
      _
    // Predicated region
    $region6: #{channel_attention.3} parent=1 // pred_check
      _
    $region7: #{channel_attention.3} parent=1 // pred_check_branch
      %12 = sbr.rel (0) target = $region9
    $region8: #{channel_attention.3} parent=1 // pred_region
      _
    $region9: #{channel_attention.3} parent=1 // pred_fallthru
      _
    // Predicated region
    $region10: #{channel_attention.3} parent=1 // pred_check
      _
    $region11: #{channel_attention.3} parent=1 // pred_check_branch
      %14 = sbr.rel (0) target = $region13
    $region12: #{channel_attention.3} parent=1 // pred_region
      _
    $region13: #{channel_attention.3} parent=1 // pred_fallthru
      _
    %v15 = vld [vmem:[%s0] sm:$0xff]
    %v16 = vld [vmem:[%s1] sm:$0xff]
    %v17 = vld [vmem:[%s1 + $0x8] sm:$0xff]
    %v18 = vld [vmem:[%s2] sm:$0x3]
    %vm19 = vcmask 130048
    %v21 = vsel %vm19, %v15, 0
    %23 = vmatpush.msra.mxu0 0.0
    %24 = vmatpush.msra.mxu0 0.0
    %25 = vmatpush.msra.mxu0 0.0
    %26 = vmatpush.msra.mxu0 0.0
    %27 = vmatpush.msra.mxu0 0.0
    %28 = vmatpush.msra.mxu0 0.0
    %29 = vmatpush.msra.mxu0 0.0
    %30 = vmatpush.msra.mxu0 0.0
    %31 = vmatpush.msra.mxu0 0.0
    %32 = vmatpush.msra.mxu0 0.0
    %33 = vmatpush.msra.mxu0 0.0
    %34 = vmatpush.msra.mxu0 0.0
    %35 = vmatpush.msra.mxu0 0.0
    %36 = vmatpush.msra.mxu0 0.0
    %37 = vmatpush.msra.mxu0 %v17
    %38 = vmatpush.msra.mxu0 %v16
    %39 = vmatmul.f32.gmra.mxu0 %v21
    %v40 = vpop.f32.mrf.mxu0
    %v41 = vadd.f32 0.0, %v40
    %42 = vdwg.mxu0
    %v43 = vmax.f32 %v41, 0.0
    %vm44 = vcmask 15360
    %v46 = vsel %vm44, %v43, 0
    %vm48 = vcmask 1041408
    %v50 = vsel %vm48, %v18, 0
    %52 = vmatpush.msra.mxu0 0.0
    %53 = vmatpush.msra.mxu0 0.0
    %54 = vmatpush.msra.mxu0 0.0
    %55 = vmatpush.msra.mxu0 0.0
    %56 = vmatpush.msra.mxu0 0.0
    %57 = vmatpush.msra.mxu0 0.0
    %58 = vmatpush.msra.mxu0 0.0
    %59 = vmatpush.msra.mxu0 0.0
    %60 = vmatpush.msra.mxu0 0.0
    %61 = vmatpush.msra.mxu0 0.0
    %62 = vmatpush.msra.mxu0 0.0
    %63 = vmatpush.msra.mxu0 0.0
    %64 = vmatpush.msra.mxu0 0.0
    %65 = vmatpush.msra.mxu0 0.0
    %66 = vmatpush.msra.mxu0 0.0
    %67 = vmatpush.msra.mxu0 %v50
    %68 = vmatmul.f32.gmra.mxu0 %v46
    %v69 = vpop.f32.mrf.mxu0
    %v70 = vadd.f32 0.0, %v69
    %71 = vdwg.mxu0
    %v73 = vrot.slane %v70, 2
    %v75 = vadd.f32 %v70, %v73
    %v76 = vxor.u32 %v75, 2147483648
    %v77 = vmul.f32 %v76, 1.442695
    %v78 = vpow.pop %v77
    %v79 = vadd.f32 %v78, 1.0
    %v80 = vrcp.pop %v79
    %v81 = vmul.f32 %v79, %v80
    %v82 = vsub.f32 1.0, %v81
    %v83 = vmul.f32 %v80, %v82
    %v84 = vadd.f32 %v80, %v83
    %vm85 = vweird.f32 %v79
    %vm86 = vweird.f32 %v80
    %vm87 = vmor %vm85, %vm86
    %v88 = vsel %vm87, %v80, %v84
    %v89 = vand.u32 2147483647, %v79
    %vm90 = vcmp.eq.f32.partialorder %v89, 8.507059e+37
    %v91 = vand.u32 %v79, 2147483648
    %v92 = vor.u32 1.1754944e-38, %v91
    %v93 = vsel %vm90, %v92, %v88
    %v94 = vmul.f32 1.0, %v93
    %vm95 = vcmask 123904
    %96 = vst.msk [vmem:[#allocation2] sm:$0x3] %vm95, %v94
    // Predicated region
    $region14: #{channel_attention.3} parent=1 // pred_check
      _
    $region15: #{channel_attention.3} parent=1 // pred_check_branch
      %98 = sbr.rel (0) target = $region17
    $region16: #{channel_attention.3} parent=1 // pred_region
      %100 = vsyncadd [#allocation3], 0
      %s102 = sshll.u32 [#allocation2], 4
      %s103 = int_to_ptr.vmem [resolvable:$true] %s102
      %s104 = sshll.u32 %s3, 4
      %s105 = int_to_ptr.hbm [resolvable:$true] %s104
      %107 = dma.vmem_to_hbm [thread:$0]  %s103, 32, %s105, [#allocation3]
    $region17: #{channel_attention.3} parent=1 // pred_fallthru
      _
    // Predicated region
    $region18: #{channel_attention.3} parent=1 // pred_check
      _
    $region19: #{channel_attention.3} parent=1 // pred_check_branch
      %109 = sbr.rel (0) target = $region21
    $region20: #{channel_attention.3} parent=1 // pred_region
      %111 = dma.done [#allocation3], 32
    $region21: #{channel_attention.3} parent=1 // pred_fallthru
      _
    %112 = vsyncpa [#allocation3], 1

// kernel: channel_attention.2
$region0: #{channel_attention.2}
  #allocation0 [shape = 'u32[]', space=smem, size = 0x4, offset = 0x4, fixed_abs, tag = 'smem constant byte address 0x4 - core index']
  #allocation1 [shape = 'u32[72,128]{1,0:T(1,128)}', space=vmem, size = 0x9000, scoped, tag = 'internal scratch']
  #allocation2 [shape = 'f32[16,128]{1,0:T(8,128)}', space=vmem, size = 0x2000, scoped, tag = 'scratch operand']
  #allocation3 [shape = 'f32[16,128]{1,0:T(8,128)}', space=vmem, size = 0x2000, scoped, tag = 'scratch operand']
  %s0 = inlined_call_operand.vmem [shape: f32[2,16,256], index: 0, kind: input, shape index: {}]
  %s1 = inlined_call_operand.vmem [shape: f32[2,16,2], index: 1, kind: output, shape index: {}]
  %s2 = sld [smem:[#allocation0]]
  $region45: #{channel_attention.2} parent=0
    _
  %s4 = ssub.s32 1, %s2
  %s5 = scalar_select 0, %s4, %s2
  loop: start=0, step=1, limit=4
  $region2: #{channel_attention.2} parent=0 // loop_pre_header
    _
  $region3: #{channel_attention.2} parent=0 // loop_header
    %s7 = sphi 0, %s11
    %p8 = scmp.ge.s32.totalorder %s7, 4
    %s14 = sphi 0, %s33
    %s15 = sphi 0, %s29
    %s16 = sphi 0, %s25
    %s17 = sphi 0, %s14
    %s18 = sphi 0, %s15
    %s19 = sphi 0, %s16
    %s20 = sphi 0, %s17
    %s21 = sphi 0, %s18
    %s22 = sphi 0, %s19
    %s40 = sphi 0, %s42
    %s43 = sphi 0, %s40
    %s44 = sphi 0, %s43
    %s60 = sphi 0, %s44
    %s68 = sphi 0, %s70
    %s71 = sphi 0, %s68
    %s72 = sphi 0, %s71
    %s88 = sphi 0, %s72
  $region4: #{channel_attention.2} parent=0 // loop_header_branch
    %10 = sbr.rel (%p8) target = $region8
  $region5: #{channel_attention.2} parent=0 // loop_body
    %s12 = ssub.s32 %s7, 1
    %s13 = ssub.s32 %s7, 2
    %s23 = sadd.s32 1, %s16
    %p24 = scmp.ge.s32.totalorder %s23, 1
    %s25 = scalar_select %p24, 0, %s23
    %s26 = sadd.s32 1, %s15
    %s27 = scalar_select %p24, %s26, %s15
    %p28 = scmp.ge.s32.totalorder %s27, 1
    %s29 = scalar_select %p28, 0, %s27
    %s30 = sadd.s32 1, %s14
    %s31 = scalar_select %p28, %s30, %s14
    %p32 = scmp.ge.s32.totalorder %s31, 2
    %s33 = scalar_select %p32, 0, %s31
    %s34 = ssub.s32 %s14, %s33
    %s35 = ssub.s32 %s15, %s29
    %s36 = sor.u32 %s34, %s35
    %s37 = ssub.s32 %s16, %s25
    %s38 = sor.u32 %s36, %s37
    %p39 = scmp.eq.s32.totalorder %s38, 0
    %s41 = sadd.s32 %s40, 1
    %s42 = scalar_select %p39, %s40, %s41
    %p45 = pneg %p39
    %p46 = scmp.eq.s32.totalorder %s7, 1
    %p47 = por %p45, %p46
    %p48 = scmp.ne.s32.totalorder %s40, %s43
    %p49 = scmp.eq.s32.totalorder %s7, 0
    %p50 = por %p48, %p49
    %p51 = scmp.ne.s32.totalorder %s40, %s43
    %p52 = scmp.eq.s32.totalorder %s12, 1
    %p53 = por %p51, %p52
    %p54 = scmp.ne.s32.totalorder %s43, %s44
    %p55 = scmp.eq.s32.totalorder %s12, 0
    %p56 = por %p54, %p55
    %p57 = scmp.ne.s32.totalorder %s43, %s44
    %p58 = scmp.eq.s32.totalorder %s13, 1
    %p59 = por %p57, %p58
    %p61 = scmp.ne.s32.totalorder %s44, %s60
    %p62 = scmp.eq.s32.totalorder %s13, 0
    %p63 = por %p61, %p62
    %s64 = ssub.s32 %s14, %s33
    %s65 = ssub.s32 %s15, %s29
    %s66 = sor.u32 %s64, %s65
    %p67 = scmp.eq.s32.totalorder %s66, 0
    %s69 = sadd.s32 %s68, 1
    %s70 = scalar_select %p67, %s68, %s69
    %p73 = pneg %p67
    %p74 = scmp.eq.s32.totalorder %s7, 1
    %p75 = por %p73, %p74
    %p76 = scmp.ne.s32.totalorder %s68, %s71
    %p77 = scmp.eq.s32.totalorder %s7, 0
    %p78 = por %p76, %p77
    %p79 = scmp.ne.s32.totalorder %s68, %s71
    %p80 = scmp.eq.s32.totalorder %s12, 1
    %p81 = por %p79, %p80
    %p82 = scmp.ne.s32.totalorder %s71, %s72
    %p83 = scmp.eq.s32.totalorder %s12, 0
    %p84 = por %p82, %p83
    %p85 = scmp.ne.s32.totalorder %s71, %s72
    %p86 = scmp.eq.s32.totalorder %s13, 1
    %p87 = por %p85, %p86
    %p89 = scmp.ne.s32.totalorder %s72, %s88
    %p90 = scmp.eq.s32.totalorder %s13, 0
    %p91 = por %p89, %p90
    %p92 = scmp.le.s32.totalorder 1, %s7
    %p93 = scmp.lt.s32.totalorder %s7, 3
    %p94 = pnand %p92, %p93
    %p95 = pneg %p94
    // Predicated region
    $region9: #{channel_attention.2} parent=5 // pred_check
      _
    $region10: #{channel_attention.2} parent=5 // pred_check_branch
      %97 = sbr.rel (%p94) target = $region12
    $region11: #{channel_attention.2} parent=5 // pred_region
      %s98 = ssub.s32 %s7, 1
    $region12: #{channel_attention.2} parent=5 // pred_fallthru
      _
    %p99 = scmp.lt.s32.totalorder %s7, 2
    // Predicated region
    $region13: #{channel_attention.2} parent=5 // pred_check
      %p100 = pneg %p99
    $region14: #{channel_attention.2} parent=5 // pred_check_branch
      %102 = sbr.rel (%p100) target = $region16
    $region15: #{channel_attention.2} parent=5 // pred_region
      // Predicated region
      $region17: #{channel_attention.2} parent=15 // pred_check
        %p103 = pneg %p50
      $region18: #{channel_attention.2} parent=15 // pred_check_branch
        %105 = sbr.rel (%p103) target = $region20
      $region19: #{channel_attention.2} parent=15 // pred_region
        %s106 = smul.u32 2, %s15
        %s107 = smul.u32 2, %s16
        %p108 = scmp.lt.s32.totalorder %s14, 1
        %s109 = scalar_select %p108, %s14, 1
        %p110 = scmp.lt.s32.totalorder %s106, 1
        %s111 = scalar_select %p110, %s106, 1
        %p112 = scmp.lt.s32.totalorder %s107, 1
        %s113 = scalar_select %p112, %s107, 1
        %s114 = smul.addr %s111, 2
        %s115 = sadd.s32 %s113, %s114
        %s116 = smul.addr %s109, 4
        %s117 = sadd.s32 %s115, %s116
        %s118 = smul.addr %s117, 8
        %s119 = scalar_lea.vmem %s0, %s118
        %s120 = smul.u32 2, %s15
        %s121 = smul.u32 2, %s16
      $region20: #{channel_attention.2} parent=15 // pred_fallthru
        _
    $region16: #{channel_attention.2} parent=5 // pred_fallthru
      _
    %p122 = scmp.le.s32.totalorder 1, %s7
    %p123 = scmp.lt.s32.totalorder %s7, 3
    %p124 = pnand %p122, %p123
    %p125 = pneg %p124
    // Predicated region
    $region21: #{channel_attention.2} parent=5 // pred_check
      _
    $region22: #{channel_attention.2} parent=5 // pred_check_branch
      %127 = sbr.rel (%p124) target = $region24
    $region23: #{channel_attention.2} parent=5 // pred_region
      %s128 = ssub.s32 %s7, 1
      %s129 = smul.u32 2, %s18
      %s130 = smul.u32 2, %s19
      %p131 = scmp.lt.s32.totalorder %s17, 1
      %s132 = scalar_select %p131, %s17, 1
      %p133 = scmp.lt.s32.totalorder %s129, 1
      %s134 = scalar_select %p133, %s129, 1
      %p135 = scmp.lt.s32.totalorder %s130, 1
      %s136 = scalar_select %p135, %s130, 1
      %s137 = smul.addr %s134, 2
      %s138 = sadd.s32 %s136, %s137
      %s139 = smul.addr %s132, 4
      %s140 = sadd.s32 %s138, %s139
      %s141 = smul.addr %s140, 8
      %s142 = scalar_lea.vmem %s0, %s141
      %p143 = pneg %p56
      %p144 = pneg %p53
      %p145 = pneg %p84
      %p146 = pneg %p81
      %s147 = smul.u32 2, %s18
      %p148 = scmp.lt.s32.totalorder %s17, 1
      %s149 = scalar_select %p148, %s17, 1
      %p150 = scmp.lt.s32.totalorder %s147, 1
      %s151 = scalar_select %p150, %s147, 1
      %s152 = smul.addr %s149, 2
      %s153 = sadd.s32 %s151, %s152
      %s154 = smul.addr %s153, 8
      %s155 = scalar_lea.vmem %s1, %s154
      %s156 = smul.u32 2, %s18
      %s157 = smul.u32 2, %s19
      %p158 = scmp.lt.s32.totalorder %s17, 1
      %s159 = scalar_select %p158, %s17, 1
      %p160 = scmp.lt.s32.totalorder %s156, 1
      %s161 = scalar_select %p160, %s156, 1
      %p162 = scmp.lt.s32.totalorder %s157, 1
      %s163 = scalar_select %p162, %s157, 1
      %s164 = smul.addr %s161, 2
      %s165 = sadd.s32 %s163, %s164
      %s166 = smul.addr %s159, 4
      %s167 = sadd.s32 %s165, %s166
      %s168 = smul.addr %s167, 8
      %s169 = scalar_lea.vmem %s0, %s168
      %s170 = smul.u32 2, %s18
      %s171 = smul.u32 2, %s19
      %s172 = smul.u32 2, %s18
      %p173 = scmp.lt.s32.totalorder %s17, 1
      %s174 = scalar_select %p173, %s17, 1
      %p175 = scmp.lt.s32.totalorder %s172, 1
      %s176 = scalar_select %p175, %s172, 1
      %s177 = smul.addr %s174, 2
      %s178 = sadd.s32 %s176, %s177
      %s179 = smul.addr %s178, 8
      %s180 = scalar_lea.vmem %s1, %s179
      %s181 = smul.u32 2, %s18
      %p182 = scmp.eq.s32.totalorder %s19, 0
      // Predicated region
      $region25: #{channel_attention.2} parent=23 // pred_check
        %p183 = pneg %p182
      $region26: #{channel_attention.2} parent=23 // pred_check_branch
        %185 = sbr.rel (%p183) target = $region28
      $region27: #{channel_attention.2} parent=23 // pred_region
        %186 = vst [vmem:[#allocation2] sm:$0xff] 0.0
        %187 = vst [vmem:[#allocation2 + $0x8] sm:$0xff] 0.0
        %188 = vst [vmem:[#allocation3] sm:$0xff] -inf
        %189 = vst [vmem:[#allocation3 + $0x8] sm:$0xff] -inf
      $region28: #{channel_attention.2} parent=23 // pred_fallthru
        _
      %v190 = vld [vmem:[%s169] sm:$0xff]
      %v191 = vld [vmem:[%s169 + $0x10] sm:$0xff]
      %v192 = vld [vmem:[#allocation2] sm:$0xff]
      %v193 = vld [vmem:[#allocation2 + $0x8] sm:$0xff]
      %v194 = vadd.f32 %v192, %v190
      %v195 = vadd.f32 %v193, %v191
      %196 = vst [vmem:[#allocation2] sm:$0xff] %v194
      %197 = vst [vmem:[#allocation2 + $0x8] sm:$0xff] %v195
      %v198 = vld [vmem:[#allocation3] sm:$0xff]
      %v199 = vld [vmem:[#allocation3 + $0x8] sm:$0xff]
      %v200 = vmax.f32 %v198, %v190
      %v201 = vmax.f32 %v199, %v191
      %202 = vst [vmem:[#allocation3] sm:$0xff] %v200
      %203 = vst [vmem:[#allocation3 + $0x8] sm:$0xff] %v201
      %v204 = vld [vmem:[%s169 + $0x8] sm:$0xff]
      %v205 = vld [vmem:[%s169 + $0x18] sm:$0xff]
      %v206 = vld [vmem:[#allocation2] sm:$0xff]
      %v207 = vld [vmem:[#allocation2 + $0x8] sm:$0xff]
      %v208 = vadd.f32 %v206, %v204
      %v209 = vadd.f32 %v207, %v205
      %210 = vst [vmem:[#allocation2] sm:$0xff] %v208
      %211 = vst [vmem:[#allocation2 + $0x8] sm:$0xff] %v209
      %v212 = vld [vmem:[#allocation3] sm:$0xff]
      %v213 = vld [vmem:[#allocation3 + $0x8] sm:$0xff]
      %v214 = vmax.f32 %v212, %v204
      %v215 = vmax.f32 %v213, %v205
      %216 = vst [vmem:[#allocation3] sm:$0xff] %v214
      %217 = vst [vmem:[#allocation3 + $0x8] sm:$0xff] %v215
      // Predicated region
      $region29: #{channel_attention.2} parent=23 // pred_check
        %p218 = pneg %p182
      $region30: #{channel_attention.2} parent=23 // pred_check_branch
        %220 = sbr.rel (%p218) target = $region32
      $region31: #{channel_attention.2} parent=23 // pred_region
        %v221 = vld [vmem:[#allocation2] sm:$0xff]
        %v222 = vld [vmem:[#allocation2 + $0x8] sm:$0xff]
        %223 = vadd.xlane.f32.xlu0 %v221
        %v224 = vpop.xlane.xlu0 %223
        %225 = vadd.xlane.f32.xlu0 %v222
        %v226 = vpop.xlane.xlu0 %225
        %v227 = vmul.f32 %v224, 0.00390625
        %v228 = vmul.f32 %v226, 0.00390625
        %v229 = vld [vmem:[#allocation3] sm:$0xff]
        %v230 = vld [vmem:[#allocation3 + $0x8] sm:$0xff]
        %231 = vmax.xlane.f32.xlu0 %v229
        %v232 = vpop.xlane.xlu0 %231
        %233 = vmax.xlane.f32.xlu0 %v230
        %v234 = vpop.xlane.xlu0 %233
        %vm235 = vcmask 7168
        %v236 = vsel %vm235, %v227, %v232
        %v237 = vsel %vm235, %v228, %v234
        %vm238 = vcmask 15360
        %239 = vst.msk [vmem:[%s180] sm:$0xff] %vm238, %v236
        %240 = vst.msk [vmem:[%s180 + $0x8] sm:$0xff] %vm238, %v237
      $region32: #{channel_attention.2} parent=23 // pred_fallthru
        _
      %s241 = smul.u32 2, %s18
      %p242 = scmp.lt.s32.totalorder %s17, 1
      %s243 = scalar_select %p242, %s17, 1
      %p244 = scmp.lt.s32.totalorder %s241, 1
      %s245 = scalar_select %p244, %s241, 1
      %s246 = smul.addr %s243, 2
      %s247 = sadd.s32 %s245, %s246
      %s248 = smul.addr %s247, 8
      %s249 = scalar_lea.vmem %s1, %s248
      // Predicated region
      $region33: #{channel_attention.2} parent=23 // pred_check
        %p250 = pneg %p81
      $region34: #{channel_attention.2} parent=23 // pred_check_branch
        %252 = sbr.rel (%p250) target = $region36
      $region35: #{channel_attention.2} parent=23 // pred_region
        %s253 = smul.u32 2, %s18
      $region36: #{channel_attention.2} parent=23 // pred_fallthru
        _
    $region24: #{channel_attention.2} parent=5 // pred_fallthru
      _
    %p254 = scmp.le.s32.totalorder 2, %s7
    // Predicated region
    $region37: #{channel_attention.2} parent=5 // pred_check
      %p255 = pneg %p254
    $region38: #{channel_attention.2} parent=5 // pred_check_branch
      %257 = sbr.rel (%p255) target = $region40
    $region39: #{channel_attention.2} parent=5 // pred_region
      %s258 = ssub.s32 %s7, 2
      // Predicated region
      $region41: #{channel_attention.2} parent=39 // pred_check
        %p259 = pneg %p87
      $region42: #{channel_attention.2} parent=39 // pred_check_branch
        %261 = sbr.rel (%p259) target = $region44
      $region43: #{channel_attention.2} parent=39 // pred_region
        %s262 = smul.u32 2, %s21
        %p263 = scmp.lt.s32.totalorder %s20, 1
        %s264 = scalar_select %p263, %s20, 1
        %p265 = scmp.lt.s32.totalorder %s262, 1
        %s266 = scalar_select %p265, %s262, 1
        %s267 = smul.addr %s264, 2
        %s268 = sadd.s32 %s266, %s267
        %s269 = smul.addr %s268, 8
        %s270 = scalar_lea.vmem %s1, %s269
      $region44: #{channel_attention.2} parent=39 // pred_fallthru
        _
    $region40: #{channel_attention.2} parent=5 // pred_fallthru
      _
  $region6: #{channel_attention.2} parent=0 // loop_footer
    %s11 = sadd.s32 1, %s7
  $region7: #{channel_attention.2} parent=0 // loop_footer_branch
    %6 = sbr.rel target = $region3
  $region8: #{channel_attention.2} parent=0 // loop_exit
    _

</llo_original>
